<compile_context>
chip_gen: v5e
topology: v5e:2x2
jax: 0.10.0
libtpu: 0.0.40
codegen_flags: <defaults>
</compile_context>

<pallas_src>
from functools import partial

import jax
import jax.numpy as jnp
from jax.experimental import pallas as pl
from jax.experimental.pallas import tpu as pltpu


def _soft_attention_kernel(x_ref, w1_ref, b12_ref, w2_ref, o_ref):
    # x:  (Bt, C_in)   f32      w1: (C_in, 128) bf16
    # b12:(2, 128)     f32      w2: (128, 128)  bf16    o: (Bt, 128) bf16
    x = x_ref[...].astype(jnp.bfloat16)          # cast on the VPU, in-kernel
    b1 = b12_ref[0:1, :]
    b2 = b12_ref[1:2, :]

    # Linear 1: bf16 operands, f32 MXU accumulation; bias + ReLU in f32 (VPU).
    h = jnp.dot(x, w1_ref[...], preferred_element_type=jnp.float32) + b1
    h = jnp.maximum(h, 0.0)

    # Linear 2 on the lane-dense padded (128-wide) output. Padded lanes give
    # sigmoid(0)=0.5 and are sliced away in the wrapper — do not consume raw
    # lanes 49..127 of the kernel output.
    logits = jnp.dot(h.astype(w2_ref.dtype), w2_ref[...],
                     preferred_element_type=jnp.float32) + b2
    # Sigmoid math in f32 (v5e has no bf16 EUP); only the store is bf16.
    o_ref[...] = jax.nn.sigmoid(logits).astype(o_ref.dtype)


def prepare_params(w1, b1, w2, b2, output_size=(7, 7), pad_to=128):
    """One-time weight prep: pad the HW output axis 49 -> 128 lanes, cast
    matmul operands to bf16 (weights-at-rest), fuse biases into one (2,128)
    f32 array."""
    out_h, out_w = output_size
    hw = out_h * out_w
    assert hw <= pad_to
    hidden = w1.shape[1]
    assert w2.shape[0] == hidden and pad_to >= hidden

    w2p = jnp.zeros((hidden, pad_to), jnp.float32).at[:, :hw].set(
        w2.astype(jnp.float32))
    b12 = jnp.zeros((2, pad_to), jnp.float32)
    b12 = b12.at[0, :hidden].set(b1.astype(jnp.float32))
    b12 = b12.at[1, :hw].set(b2.astype(jnp.float32))
    return (w1.astype(jnp.bfloat16), b12, w2p.astype(jnp.bfloat16))


@partial(jax.jit, static_argnames=("output_size", "block_b"))
def soft_attention_forward(head_features, params, output_size=(7, 7),
                           block_b=None):
    """head_features: (B, head_channels) f32 -> attention weights (B,1,H,W)."""
    w1, b12, w2p = params
    B, c_in = head_features.shape
    hidden = w1.shape[1]
    out_h, out_w = output_size
    hw = out_h * out_w
    pad_n = w2p.shape[1]

    out_shape = jax.ShapeDtypeStruct((B, pad_n), jnp.bfloat16)

    if block_b is not None and B % block_b == 0 and B // block_b > 1:
        # 1-D parallel grid over the batch: both v7x TCs, bounded VMEM.
        out = pl.pallas_call(
            _soft_attention_kernel,
            out_shape=out_shape,
            grid=(B // block_b,),
            in_specs=[
                pl.BlockSpec((block_b, c_in), lambda i: (i, 0)),
                pl.BlockSpec((c_in, hidden), lambda i: (0, 0)),
                pl.BlockSpec((2, pad_n), lambda i: (0, 0)),
                pl.BlockSpec((hidden, pad_n), lambda i: (0, 0)),
            ],
            out_specs=pl.BlockSpec((block_b, pad_n), lambda i: (i, 0)),
            compiler_params=pltpu.CompilerParams(
                dimension_semantics=("parallel",)),
        )(head_features, w1, b12, w2p)
    else:
        # Gridless: full-array VMEM blocks, no pipeline machinery for a
        # few-hundred-cycle kernel.
        vmem = pl.BlockSpec(memory_space=pltpu.MemorySpace.VMEM)
        out = pl.pallas_call(
            _soft_attention_kernel,
            out_shape=out_shape,
            in_specs=[vmem, vmem, vmem, vmem],
            out_specs=vmem,
        )(head_features, w1, b12, w2p)

    # Slice/reshape fused into this jit; matches PyTorch
    # attn_weights.view(batch_size, 1, output_h, output_w).
    return out[:, :hw].reshape(B, 1, out_h, out_w)


def init_params(key, head_channels=256, hidden=128, output_size=(7, 7)):
    """Deterministic PyTorch-Linear-style uniform init (synthetic weights)."""
    out_h, out_w = output_size
    hw = out_h * out_w
    k1, k2, k3, k4 = jax.random.split(key, 4)
    bound1 = 1.0 / (head_channels ** 0.5)
    bound2 = 1.0 / (hidden ** 0.5)
    # stored as (in, out) so the kernel does x @ W directly
    w1 = jax.random.uniform(k1, (head_channels, hidden), jnp.float32, -bound1, bound1)
    b1 = jax.random.uniform(k2, (hidden,), jnp.float32, -bound1, bound1)
    w2 = jax.random.uniform(k3, (hidden, hw), jnp.float32, -bound2, bound2)
    b2 = jax.random.uniform(k4, (hw,), jnp.float32, -bound2, bound2)
    return w1, b1, w2, b2


def _reference_f32(x, w1, b1, w2, b2, output_size):
    out_h, out_w = output_size
    B = x.shape[0]
    return jax.nn.sigmoid(
        jnp.maximum(x @ w1 + b1, 0.0) @ w2 + b2
    ).reshape(B, 1, out_h, out_w)


if __name__ == "__main__":
    head_channels = 256      # fixed by the module's Linear(256, 128)
    hidden = 128
    output_size = (7, 7)

    key = jax.random.PRNGKey(0)
    k_params, k_x_small, k_x_big = jax.random.split(key, 3)

    w1, b1, w2, b2 = init_params(k_params, head_channels, hidden, output_size)
    params = prepare_params(w1, b1, w2, b2, output_size)

    # --- gridless path (small batch) ---
    batch = 8
    x_small = jax.random.normal(k_x_small, (batch, head_channels), jnp.float32)
    attn = soft_attention_forward(x_small, params, output_size)
    attn = jax.block_until_ready(attn)
    assert attn.shape == (batch, 1, *output_size)
    assert attn.dtype == jnp.bfloat16

    ref = _reference_f32(x_small, w1, b1, w2, b2, output_size)
    # bf16 operands / bf16 output: loose tolerance vs the f32 PyTorch forward.
    assert jnp.allclose(attn.astype(jnp.float32), ref, atol=2e-2, rtol=2e-2)

    # --- grid-over-B path (exercised at small scale) ---
    batch_big = 32
    x_big = jax.random.normal(k_x_big, (batch_big, head_channels), jnp.float32)
    attn_big = soft_attention_forward(x_big, params, output_size, block_b=16)
    attn_big = jax.block_until_ready(attn_big)
    assert attn_big.shape == (batch_big, 1, *output_size)

    ref_big = _reference_f32(x_big, w1, b1, w2, b2, output_size)
    assert jnp.allclose(attn_big.astype(jnp.float32), ref_big,
                        atol=2e-2, rtol=2e-2)

    print("KERNEL_OK")
</pallas_src>

<mosaic_0001>
module attributes {stable_mosaic.version = 11 : i64} {
  func.func @_soft_attention_kernel(%arg0: memref<8x256xf32, #tpu.memory_space<vmem>>, %arg1: memref<256x128xbf16, #tpu.memory_space<vmem>>, %arg2: memref<2x128xf32, #tpu.memory_space<vmem>>, %arg3: memref<128x128xbf16, #tpu.memory_space<vmem>>, %arg4: memref<8x128xbf16, #tpu.memory_space<vmem>>) attributes {dimension_semantics = [], scalar_prefetch = 0 : i64, scratch_operands = 0 : i64, tpu.core_type = #tpu.core_type<tc>} {
    %c0 = arith.constant 0 : index
    %c0_0 = arith.constant 0 : index
    %0 = vector.load %arg0[%c0, %c0_0] : memref<8x256xf32, #tpu.memory_space<vmem>>, vector<8x256xf32>
    %1 = arith.truncf %0 : vector<8x256xf32> to vector<8x256xbf16>
    %c0_1 = arith.constant 0 : index
    %c0_2 = arith.constant 0 : index
    %2 = vector.load %arg2[%c0_1, %c0_2] : memref<2x128xf32, #tpu.memory_space<vmem>>, vector<1x128xf32>
    %c1 = arith.constant 1 : index
    %c0_3 = arith.constant 0 : index
    %3 = vector.load %arg2[%c1, %c0_3] : memref<2x128xf32, #tpu.memory_space<vmem>>, vector<1x128xf32>
    %c0_4 = arith.constant 0 : index
    %c0_5 = arith.constant 0 : index
    %4 = vector.load %arg1[%c0_4, %c0_5] : memref<256x128xbf16, #tpu.memory_space<vmem>>, vector<256x128xbf16>
    %cst = arith.constant dense<0.000000e+00> : vector<8x128xf32>
    %5 = tpu.matmul %1, %4, %cst {dimension_numbers = #tpu.dot_dimension_numbers<[1], [0], [0], [1], [0, 0, 1, 1], [], []>} : vector<8x256xbf16>, vector<256x128xbf16>, vector<8x128xf32> -> vector<8x128xf32>
    %6 = vector.broadcast %2 : vector<1x128xf32> to vector<8x128xf32>
    %7 = arith.addf %5, %6 : vector<8x128xf32>
    %cst_6 = arith.constant 0.000000e+00 : f32
    %8 = vector.broadcast %cst_6 : f32 to vector<8x128xf32>
    %9 = arith.maximumf %7, %8 : vector<8x128xf32>
    %10 = arith.truncf %9 : vector<8x128xf32> to vector<8x128xbf16>
    %c0_7 = arith.constant 0 : index
    %c0_8 = arith.constant 0 : index
    %11 = vector.load %arg3[%c0_7, %c0_8] : memref<128x128xbf16, #tpu.memory_space<vmem>>, vector<128x128xbf16>
    %cst_9 = arith.constant dense<0.000000e+00> : vector<8x128xf32>
    %12 = tpu.matmul %10, %11, %cst_9 {dimension_numbers = #tpu.dot_dimension_numbers<[1], [0], [0], [1], [0, 0, 1, 1], [], []>} : vector<8x128xbf16>, vector<128x128xbf16>, vector<8x128xf32> -> vector<8x128xf32>
    %13 = vector.broadcast %3 : vector<1x128xf32> to vector<8x128xf32>
    %14 = arith.addf %12, %13 : vector<8x128xf32>
    %15 = arith.negf %14 : vector<8x128xf32>
    %16 = math.exp %15 : vector<8x128xf32>
    %cst_10 = arith.constant 1.000000e+00 : f32
    %17 = vector.broadcast %cst_10 : f32 to vector<8x128xf32>
    %18 = arith.addf %17, %16 : vector<8x128xf32>
    %19 = arith.divf %17, %18 : vector<8x128xf32>
    %20 = arith.truncf %19 : vector<8x128xf32> to vector<8x128xbf16>
    %c0_11 = arith.constant 0 : index
    %c0_12 = arith.constant 0 : index
    %21 = vector.load %arg4[%c0_11, %c0_12] : memref<8x128xbf16, #tpu.memory_space<vmem>>, vector<8x128xbf16>
    tpu.vector_store %arg4[%c0_11, %c0_12], %20 {strides = array<i32>} : memref<8x128xbf16, #tpu.memory_space<vmem>>, vector<8x128xbf16>,
    return
  }
}

</mosaic_0001>

<llo_original>
// kernel: soft_attention_forward.1
$region0: #{soft_attention_forward.1}
  #allocation0 [shape = 'u32[]', space=smem, size = 0x4, offset = 0x4, fixed_abs, tag = 'smem constant byte address 0x4 - core index']
  #allocation1 [shape = 'u32[72,128]{1,0:T(1,128)}', space=vmem, size = 0x9000, scoped, tag = 'internal scratch']
  %s0 = inlined_call_operand.hbm [shape: f32[8,256], index: 0, kind: input, shape index: {}]
  %s1 = inlined_call_operand.hbm [shape: bf16[256,128], index: 1, kind: input, shape index: {}]
  %s2 = inlined_call_operand.hbm [shape: f32[2,128], index: 2, kind: input, shape index: {}]
  %s3 = inlined_call_operand.hbm [shape: bf16[128,128], index: 3, kind: input, shape index: {}]
  %s4 = inlined_call_operand.vmem [shape: bf16[8,128], index: 4, kind: output, shape index: {}]
  %s5 = sld [smem:[#allocation0]]
  $region42: #{soft_attention_forward.1} parent=0
    _
  %s7 = ssub.s32 1, %s5
  %s8 = scalar_select 0, %s7, %s5
  $region1: #{soft_attention_forward.1} parent=0
    #allocation2 [shape = 'u8[8192]{0}', space=vmem, size = 0x2000, scoped, tag = 'input window, operand 0, single buffered']
    #allocation3 [shape = 's32[1]{0}', space=sflag, size = 0x4, scoped, tag = 'scoped memory for soft_attention_forward.1']
    #allocation4 [shape = 'u8[65536]{0}', space=vmem, size = 0x10000, scoped, tag = 'input window, operand 1, single buffered']
    #allocation5 [shape = 's32[1]{0}', space=sflag, size = 0x4, scoped, tag = 'scoped memory for soft_attention_forward.1']
    #allocation6 [shape = 'u8[1024]{0}', space=vmem, size = 0x400, scoped, tag = 'input window, operand 2, single buffered']
    #allocation7 [shape = 'u8[32768]{0}', space=vmem, size = 0x8000, scoped, tag = 'input window, operand 3, single buffered']
    #allocation8 [shape = 's32[1]{0}', space=sflag, size = 0x4, scoped, tag = 'scoped memory for soft_attention_forward.1']
    %9 = vsyncpa [#allocation3], 0
    %10 = vsyncpa [#allocation5], 0
    %11 = vsyncpa [#allocation8], 0
    // Predicated region
    $region2: #{soft_attention_forward.1} parent=1 // pred_check
      _
    $region3: #{soft_attention_forward.1} parent=1 // pred_check_branch
      %13 = sbr.rel (0) target = $region5
    $region4: #{soft_attention_forward.1} parent=1 // pred_region
      %15 = vsyncadd [#allocation3], 0
      %s17 = sshll.u32 %s0, 4
      %s18 = int_to_ptr.hbm [resolvable:$true] %s17
      %s19 = sshll.u32 [#allocation2], 4
      %s20 = int_to_ptr.vmem [resolvable:$true] %s19
      %22 = dma.hbm_to_vmem [thread:$0]  %s18, 256, %s20, [#allocation3]
    $region5: #{soft_attention_forward.1} parent=1 // pred_fallthru
      _
    // Predicated region
    $region6: #{soft_attention_forward.1} parent=1 // pred_check
      _
    $region7: #{soft_attention_forward.1} parent=1 // pred_check_branch
      %24 = sbr.rel (0) target = $region9
    $region8: #{soft_attention_forward.1} parent=1 // pred_region
      %26 = vsyncadd [#allocation5], 0
      %s27 = sshll.u32 %s1, 4
      %s28 = int_to_ptr.hbm [resolvable:$true] %s27
      %s29 = sshll.u32 [#allocation4], 4
      %s30 = int_to_ptr.vmem [resolvable:$true] %s29
      %35 = dma.hbm_to_vmem [thread:$0]  %s28, 2048, %s30, [#allocation5], 64, 64, 4
    $region9: #{soft_attention_forward.1} parent=1 // pred_fallthru
      _
    // Predicated region
    $region10: #{soft_attention_forward.1} parent=1 // pred_check
      _
    $region11: #{soft_attention_forward.1} parent=1 // pred_check_branch
      %37 = sbr.rel (0) target = $region13
    $region12: #{soft_attention_forward.1} parent=1 // pred_region
      %39 = vsyncadd [#allocation5], 0
      %s41 = sshll.u32 %s2, 4
      %s42 = int_to_ptr.hbm [resolvable:$true] %s41
      %s43 = sshll.u32 [#allocation6], 4
      %s44 = int_to_ptr.vmem [resolvable:$true] %s43
      %46 = dma.hbm_to_vmem [thread:$0]  %s42, 32, %s44, [#allocation5]
    $region13: #{soft_attention_forward.1} parent=1 // pred_fallthru
      _
    // Predicated region
    $region14: #{soft_attention_forward.1} parent=1 // pred_check
      _
    $region15: #{soft_attention_forward.1} parent=1 // pred_check_branch
      %48 = sbr.rel (0) target = $region17
    $region16: #{soft_attention_forward.1} parent=1 // pred_region
      %50 = vsyncadd [#allocation8], 0
      %s51 = sshll.u32 %s3, 4
      %s52 = int_to_ptr.hbm [resolvable:$true] %s51
      %s53 = sshll.u32 [#allocation7], 4
      %s54 = int_to_ptr.vmem [resolvable:$true] %s53
      %59 = dma.hbm_to_vmem [thread:$0]  %s52, 1024, %s54, [#allocation8], 64, 64, 4
    $region17: #{soft_attention_forward.1} parent=1 // pred_fallthru
      _
    // Predicated region
    $region18: #{soft_attention_forward.1} parent=1 // pred_check
      _
    $region19: #{soft_attention_forward.1} parent=1 // pred_check_branch
      %61 = sbr.rel (0) target = $region21
    $region20: #{soft_attention_forward.1} parent=1 // pred_region
      %63 = dma.done [#allocation3], 256
    $region21: #{soft_attention_forward.1} parent=1 // pred_fallthru
      _
    // Predicated region
    $region22: #{soft_attention_forward.1} parent=1 // pred_check
      _
    $region23: #{soft_attention_forward.1} parent=1 // pred_check_branch
      %65 = sbr.rel (0) target = $region25
    $region24: #{soft_attention_forward.1} parent=1 // pred_region
      %67 = dma.done [#allocation5], 2048
    $region25: #{soft_attention_forward.1} parent=1 // pred_fallthru
      _
    // Predicated region
    $region26: #{soft_attention_forward.1} parent=1 // pred_check
      _
    $region27: #{soft_attention_forward.1} parent=1 // pred_check_branch
      %69 = sbr.rel (0) target = $region29
    $region28: #{soft_attention_forward.1} parent=1 // pred_region
      %71 = dma.done [#allocation5], 32
    $region29: #{soft_attention_forward.1} parent=1 // pred_fallthru
      _
    // Predicated region
    $region30: #{soft_attention_forward.1} parent=1 // pred_check
      _
    $region31: #{soft_attention_forward.1} parent=1 // pred_check_branch
      %73 = sbr.rel (0) target = $region33
    $region32: #{soft_attention_forward.1} parent=1 // pred_region
      %75 = dma.done [#allocation8], 1024
    $region33: #{soft_attention_forward.1} parent=1 // pred_fallthru
      _
    %v76 = vld [vmem:[#allocation2] sm:$0xff]
    %v77 = vld [vmem:[#allocation2 + $0x8] sm:$0xff]
    %v78 = vpack.c.bf16 %v76, %v76
    %v79 = vpack.c.bf16 %v77, %v77
    %v80 = vld [vmem:[#allocation6] sm:$0x1]
    %v81 = vld [vmem:[#allocation6 + $0x1] sm:$0x1]
    %v82 = vld [vmem:[#allocation4] sm:$0xf]
    %v83 = vld [vmem:[#allocation4 + $0x4] sm:$0xf]
    %v84 = vld [vmem:[#allocation4 + $0x8] sm:$0xf]
    %v85 = vld [vmem:[#allocation4 + $0xc] sm:$0xf]
    %v86 = vld [vmem:[#allocation4 + $0x10] sm:$0xf]
    %v87 = vld [vmem:[#allocation4 + $0x14] sm:$0xf]
    %v88 = vld [vmem:[#allocation4 + $0x18] sm:$0xf]
    %v89 = vld [vmem:[#allocation4 + $0x1c] sm:$0xf]
    %v90 = vld [vmem:[#allocation4 + $0x20] sm:$0xf]
    %v91 = vld [vmem:[#allocation4 + $0x24] sm:$0xf]
    %v92 = vld [vmem:[#allocation4 + $0x28] sm:$0xf]
    %v93 = vld [vmem:[#allocation4 + $0x2c] sm:$0xf]
    %v94 = vld [vmem:[#allocation4 + $0x30] sm:$0xf]
    %v95 = vld [vmem:[#allocation4 + $0x34] sm:$0xf]
    %v96 = vld [vmem:[#allocation4 + $0x38] sm:$0xf]
    %v97 = vld [vmem:[#allocation4 + $0x3c] sm:$0xf]
    %v98 = vld [vmem:[#allocation4 + $0x40] sm:$0xf]
    %v99 = vld [vmem:[#allocation4 + $0x44] sm:$0xf]
    %v100 = vld [vmem:[#allocation4 + $0x48] sm:$0xf]
    %v101 = vld [vmem:[#allocation4 + $0x4c] sm:$0xf]
    %v102 = vld [vmem:[#allocation4 + $0x50] sm:$0xf]
    %v103 = vld [vmem:[#allocation4 + $0x54] sm:$0xf]
    %v104 = vld [vmem:[#allocation4 + $0x58] sm:$0xf]
    %v105 = vld [vmem:[#allocation4 + $0x5c] sm:$0xf]
    %v106 = vld [vmem:[#allocation4 + $0x60] sm:$0xf]
    %v107 = vld [vmem:[#allocation4 + $0x64] sm:$0xf]
    %v108 = vld [vmem:[#allocation4 + $0x68] sm:$0xf]
    %v109 = vld [vmem:[#allocation4 + $0x6c] sm:$0xf]
    %v110 = vld [vmem:[#allocation4 + $0x70] sm:$0xf]
    %v111 = vld [vmem:[#allocation4 + $0x74] sm:$0xf]
    %v112 = vld [vmem:[#allocation4 + $0x78] sm:$0xf]
    %v113 = vld [vmem:[#allocation4 + $0x7c] sm:$0xf]
    %v114 = vperm.slane %v80, 0
    %v147 = vunpack.c.l.b16 %v82
    %v148 = vunpack.c.l.b16 %v83
    %v149 = vunpack.c.l.b16 %v84
    %v150 = vunpack.c.l.b16 %v85
    %v151 = vunpack.c.l.b16 %v86
    %v152 = vunpack.c.l.b16 %v87
    %v153 = vunpack.c.l.b16 %v88
    %v154 = vunpack.c.l.b16 %v89
    %v155 = vunpack.c.l.b16 %v90
    %v156 = vunpack.c.l.b16 %v91
    %v157 = vunpack.c.l.b16 %v92
    %v158 = vunpack.c.l.b16 %v93
    %v159 = vunpack.c.l.b16 %v94
    %v160 = vunpack.c.l.b16 %v95
    %v161 = vunpack.c.l.b16 %v96
    %v162 = vunpack.c.l.b16 %v97
    %v163 = vunpack.c.l.b16 %v98
    %v164 = vunpack.c.l.b16 %v99
    %v165 = vunpack.c.l.b16 %v100
    %v166 = vunpack.c.l.b16 %v101
    %v167 = vunpack.c.l.b16 %v102
    %v168 = vunpack.c.l.b16 %v103
    %v169 = vunpack.c.l.b16 %v104
    %v170 = vunpack.c.l.b16 %v105
    %v171 = vunpack.c.l.b16 %v106
    %v172 = vunpack.c.l.b16 %v107
    %v173 = vunpack.c.l.b16 %v108
    %v174 = vunpack.c.l.b16 %v109
    %v175 = vunpack.c.l.b16 %v110
    %v176 = vunpack.c.l.b16 %v111
    %v177 = vunpack.c.l.b16 %v112
    %v178 = vunpack.c.l.b16 %v113
    %v179 = vpack.c.b16 %v148, %v147
    %v180 = vpack.c.b16 %v150, %v149
    %v181 = vpack.c.b16 %v152, %v151
    %v182 = vpack.c.b16 %v154, %v153
    %v183 = vpack.c.b16 %v156, %v155
    %v184 = vpack.c.b16 %v158, %v157
    %v185 = vpack.c.b16 %v160, %v159
    %v186 = vpack.c.b16 %v162, %v161
    %v187 = vpack.c.b16 %v164, %v163
    %v188 = vpack.c.b16 %v166, %v165
    %v189 = vpack.c.b16 %v168, %v167
    %v190 = vpack.c.b16 %v170, %v169
    %v191 = vpack.c.b16 %v172, %v171
    %v192 = vpack.c.b16 %v174, %v173
    %v193 = vpack.c.b16 %v176, %v175
    %v194 = vpack.c.b16 %v178, %v177
    %211 = vmatpush.bf16.msra.mxu0 %v186
    %212 = vmatpush.bf16.msra.mxu0 %v185
    %213 = vmatpush.bf16.msra.mxu0 %v184
    %214 = vmatpush.bf16.msra.mxu0 %v183
    %215 = vmatpush.bf16.msra.mxu0 %v182
    %216 = vmatpush.bf16.msra.mxu0 %v181
    %217 = vmatpush.bf16.msra.mxu0 %v180
    %218 = vmatpush.bf16.msra.mxu0 %v179
    %219 = vmatmul.bf16.gmra.mxu0 %v78
    %v220 = vpop.f32.mrf.mxu0
    %v221 = vadd.f32 %v114, %v220
    %v222 = vpop.f32.mrf.mxu0
    %223 = vdwg.mxu0
    %224 = vmatpush.bf16.msra.mxu0 %v194
    %225 = vmatpush.bf16.msra.mxu0 %v193
    %226 = vmatpush.bf16.msra.mxu0 %v192
    %227 = vmatpush.bf16.msra.mxu0 %v191
    %228 = vmatpush.bf16.msra.mxu0 %v190
    %229 = vmatpush.bf16.msra.mxu0 %v189
    %230 = vmatpush.bf16.msra.mxu0 %v188
    %231 = vmatpush.bf16.msra.mxu0 %v187
    %232 = vmatmul.bf16.gmra.mxu0 %v79
    %v233 = vpop.f32.mrf.mxu0
    %v234 = vadd.f32 %v221, %v233
    %v235 = vpop.f32.mrf.mxu0
    %236 = vdwg.mxu0
    %v237 = vmax.f32 %v234, 0.0
    %v238 = vpack.c.bf16 %v237, %v237
    %v239 = vld [vmem:[#allocation7] sm:$0xf]
    %v240 = vld [vmem:[#allocation7 + $0x4] sm:$0xf]
    %v241 = vld [vmem:[#allocation7 + $0x8] sm:$0xf]
    %v242 = vld [vmem:[#allocation7 + $0xc] sm:$0xf]
    %v243 = vld [vmem:[#allocation7 + $0x10] sm:$0xf]
    %v244 = vld [vmem:[#allocation7 + $0x14] sm:$0xf]
    %v245 = vld [vmem:[#allocation7 + $0x18] sm:$0xf]
    %v246 = vld [vmem:[#allocation7 + $0x1c] sm:$0xf]
    %v247 = vld [vmem:[#allocation7 + $0x20] sm:$0xf]
    %v248 = vld [vmem:[#allocation7 + $0x24] sm:$0xf]
    %v249 = vld [vmem:[#allocation7 + $0x28] sm:$0xf]
    %v250 = vld [vmem:[#allocation7 + $0x2c] sm:$0xf]
    %v251 = vld [vmem:[#allocation7 + $0x30] sm:$0xf]
    %v252 = vld [vmem:[#allocation7 + $0x34] sm:$0xf]
    %v253 = vld [vmem:[#allocation7 + $0x38] sm:$0xf]
    %v254 = vld [vmem:[#allocation7 + $0x3c] sm:$0xf]
    %v255 = vperm.slane %v81, 0
    %v272 = vunpack.c.l.b16 %v239
    %v273 = vunpack.c.l.b16 %v240
    %v274 = vunpack.c.l.b16 %v241
    %v275 = vunpack.c.l.b16 %v242
    %v276 = vunpack.c.l.b16 %v243
    %v277 = vunpack.c.l.b16 %v244
    %v278 = vunpack.c.l.b16 %v245
    %v279 = vunpack.c.l.b16 %v246
    %v280 = vunpack.c.l.b16 %v247
    %v281 = vunpack.c.l.b16 %v248
    %v282 = vunpack.c.l.b16 %v249
    %v283 = vunpack.c.l.b16 %v250
    %v284 = vunpack.c.l.b16 %v251
    %v285 = vunpack.c.l.b16 %v252
    %v286 = vunpack.c.l.b16 %v253
    %v287 = vunpack.c.l.b16 %v254
    %v288 = vpack.c.b16 %v273, %v272
    %v289 = vpack.c.b16 %v275, %v274
    %v290 = vpack.c.b16 %v277, %v276
    %v291 = vpack.c.b16 %v279, %v278
    %v292 = vpack.c.b16 %v281, %v280
    %v293 = vpack.c.b16 %v283, %v282
    %v294 = vpack.c.b16 %v285, %v284
    %v295 = vpack.c.b16 %v287, %v286
    %304 = vmatpush.bf16.msra.mxu0 %v295
    %305 = vmatpush.bf16.msra.mxu0 %v294
    %306 = vmatpush.bf16.msra.mxu0 %v293
    %307 = vmatpush.bf16.msra.mxu0 %v292
    %308 = vmatpush.bf16.msra.mxu0 %v291
    %309 = vmatpush.bf16.msra.mxu0 %v290
    %310 = vmatpush.bf16.msra.mxu0 %v289
    %311 = vmatpush.bf16.msra.mxu0 %v288
    %312 = vmatmul.bf16.gmra.mxu0 %v238
    %v313 = vpop.f32.mrf.mxu0
    %v314 = vadd.f32 %v255, %v313
    %v315 = vpop.f32.mrf.mxu0
    %316 = vdwg.mxu0
    %v317 = vxor.u32 %v314, 2147483648
    %v318 = vmul.f32 %v317, 1.442695
    %v319 = vpow.pop %v318
    %v320 = vadd.f32 %v319, 1.0
    %v321 = vrcp.pop %v320
    %v322 = vmul.f32 %v320, %v321
    %v323 = vsub.f32 1.0, %v322
    %v324 = vmul.f32 %v321, %v323
    %v325 = vadd.f32 %v321, %v324
    %vm326 = vweird.f32 %v320
    %vm327 = vweird.f32 %v321
    %vm328 = vmor %vm326, %vm327
    %v329 = vsel %vm328, %v321, %v325
    %v330 = vand.u32 2147483647, %v320
    %vm331 = vcmp.eq.f32.partialorder %v330, 8.507059e+37
    %v332 = vand.u32 %v320, 2147483648
    %v333 = vor.u32 1.1754944e-38, %v332
    %v334 = vsel %vm331, %v333, %v329
    %v335 = vmul.f32 1.0, %v334
    %v336 = vpack.c.bf16 %v335, %v335
    %337 = vst [vmem:[%s4] sm:$0xf] %v336
    // Predicated region
    $region34: #{soft_attention_forward.1} parent=1 // pred_check
      _
    $region35: #{soft_attention_forward.1} parent=1 // pred_check_branch
      %339 = sbr.rel (0) target = $region37
    $region36: #{soft_attention_forward.1} parent=1 // pred_region
      _
    $region37: #{soft_attention_forward.1} parent=1 // pred_fallthru
      _
    // Predicated region
    $region38: #{soft_attention_forward.1} parent=1 // pred_check
      _
    $region39: #{soft_attention_forward.1} parent=1 // pred_check_branch
      %341 = sbr.rel (0) target = $region41
    $region40: #{soft_attention_forward.1} parent=1 // pred_region
      _
    $region41: #{soft_attention_forward.1} parent=1 // pred_fallthru
      _
    %342 = vsyncpa [#allocation3], 1
    %343 = vsyncpa [#allocation5], 1
    %344 = vsyncpa [#allocation8], 1

</llo_original>
